<compile_context>
chip_gen: v7x
topology: tpu7x:2x2x1
jax: 0.10.0
libtpu: 0.0.40
codegen_flags: <defaults>
</compile_context>

<pallas_src>
import functools

import jax
import jax.numpy as jnp
import numpy as np
from jax.experimental import pallas as pl
from jax.experimental.pallas import tpu as pltpu

VMEM_SPEC = pl.BlockSpec(memory_space=pltpu.MemorySpace.VMEM)


def _round_up(x, m):
    return ((x + m - 1) // m) * m


# ----------------------------- Pallas kernels ------------------------------

def _fourier_kernel(x_ref, out_ref, *, inv_scales):
    # multiscale(x) = hstack([x / s for s in scales]); out = [sin(ms), cos(ms)]
    # Scale reciprocals are baked-in Python constants -> the (n, L*din) multiscale
    # intermediate never round-trips through HBM.
    x = x_ref[...]
    ms = jnp.concatenate([x * s for s in inv_scales], axis=-1)
    out_ref[...] = jnp.concatenate([jnp.sin(ms), jnp.cos(ms)], axis=-1)


def _bgc_kernel(xi_ref, xj_ref, ea_ref, tgt_ref, right_ref,
                wlr_ref, bl_ref, we_ref, wf_ref, bf_ref,
                wo1_ref, bo1_ref, wo2_ref, bo2_ref,
                out_ref, agg_ref):
    """One BipartiteGraphConv, edge-tiled.

    Grid axis 0 walks edge tiles ("arbitrary" / reduction); agg_ref is the
    (N_pad, H) f32 'add'-aggregation accumulator (VMEM scratch, resident
    across the whole grid).  Weights / right features are VMEM-resident
    (constant index_maps).
    """
    f32 = jnp.float32
    e = pl.program_id(0)

    @pl.when(e == 0)
    def _init():
        agg_ref[...] = jnp.zeros_like(agg_ref)

    te = xi_ref.shape[0]
    n_pad = agg_ref.shape[0]

    # --- per-edge message MLP (fused K=2H matmul on the MXU) -----------------
    xij = jnp.concatenate([xi_ref[...], xj_ref[...]], axis=-1)            # (TE, 2H)
    z = (jnp.dot(xij, wlr_ref[...], preferred_element_type=f32)
         + bl_ref[...]                                                    # Linear(H,H) bias
         + ea_ref[...] * we_ref[...])                                     # Linear(1,H,bias=False)
    # feature_module_final = PreNormLayer(1, shift=False) [identity] -> ReLU -> Linear
    m = jnp.dot(jnp.maximum(z, 0.0), wf_ref[...], preferred_element_type=f32) + bf_ref[...]

    # --- 'add' scatter onto target nodes -------------------------------------
    # Tile-local one-hot lives only in VMEM/vregs and is contracted on the MXU.
    # Padded edges carry tgt == N_pad and therefore match no node row.
    # TODO(synk): for very large graphs, sort edges by target and tile the node
    # axis too (PrefetchScalarGridSpec per-block edge offsets) so the one-hot
    # stays (TN, TE) instead of (N_pad, TE).
    tgt_row = tgt_ref[0:1, :]                                             # (1, TE) int32
    oh = (jax.lax.broadcasted_iota(jnp.int32, (n_pad, te), 0)
          == tgt_row).astype(f32)                                         # (N_pad, TE)
    agg_ref[...] += jnp.dot(oh, m, preferred_element_type=f32)            # (N_pad, H)

    # --- output MLP, fused into the last edge tile ---------------------------
    @pl.when(e == pl.num_programs(0) - 1)
    def _finalize():
        # post_conv_module = PreNormLayer(1, shift=False) -> identity
        h = jnp.concatenate([agg_ref[...], right_ref[...]], axis=-1)      # (N_pad, 2H)
        h1 = jnp.maximum(jnp.dot(h, wo1_ref[...], preferred_element_type=f32)
                         + bo1_ref[...], 0.0)
        out_ref[...] = jnp.dot(h1, wo2_ref[...], preferred_element_type=f32) + bo2_ref[...]


def _readout_kernel(xs_ref, xt_ref, ps_ref, pt_ref,
                    ws_ref, bs_ref, wt_ref, bt_ref,
                    w1_ref, b1_ref, w2_ref, b2_ref, out_ref):
    """mlp_xs / mlp_xt -> global mean pool -> average -> fc head (all on the MXU)."""
    f32 = jnp.float32
    ys = jnp.maximum(jnp.dot(xs_ref[...], ws_ref[...], preferred_element_type=f32) + bs_ref[...], 0.0)
    yt = jnp.maximum(jnp.dot(xt_ref[...], wt_ref[...], preferred_element_type=f32) + bt_ref[...], 0.0)
    gs = jnp.dot(ps_ref[...], ys, preferred_element_type=f32)      # global_mean_pool(x_s)
    gt = jnp.dot(pt_ref[...], yt, preferred_element_type=f32)      # global_mean_pool(x_t)
    g = (gs + gt) * 0.5
    h = jnp.maximum(jnp.dot(g, w1_ref[...], preferred_element_type=f32) + b1_ref[...], 0.0)
    # final Linear(mlp_hidden, 1) as a matmul (not a cross-lane reduce)
    out_ref[...] = jnp.dot(h, w2_ref[...], preferred_element_type=f32) + b2_ref[...]


# ------------------------------ JAX wrappers --------------------------------

def fourier_encode(x, hidden_dim):
    n, din = x.shape
    assert hidden_dim % (2 * din) == 0, "hidden_dim must be divisible by 2*input_dim"
    level = hidden_dim / (2 * din)
    exps = np.arange(-level / 2, level / 2)
    inv_scales = tuple(float(2.0 ** (-a)) for a in exps)
    out_dim = 2 * len(inv_scales) * din
    assert out_dim == hidden_dim
    return pl.pallas_call(
        functools.partial(_fourier_kernel, inv_scales=inv_scales),
        out_shape=jax.ShapeDtypeStruct((n, out_dim), x.dtype),
        in_specs=[VMEM_SPEC],
        out_specs=VMEM_SPEC,
    )(x)


def bipartite_graph_conv(p, left, right, edges, edge_tile):
    """left/right: (N_pad, H) node features; edges: padded, layer-invariant edge data."""
    n_pad, h = right.shape
    e_pad = edges['ea'].shape[0]
    te = edge_tile
    assert e_pad % te == 0

    # glue: gather per-edge endpoint features (features change per layer, indices don't)
    xi = jnp.take(right, edges['gather_tgt'], axis=0)     # node_features_i (target side)
    xj = jnp.take(left, edges['gather_src'], axis=0)      # node_features_j (source side)

    edge_h = pl.BlockSpec((te, h), lambda e: (e, 0))
    edge_1 = pl.BlockSpec((te, 1), lambda e: (e, 0))
    idx_sp = pl.BlockSpec((8, te), lambda e: (0, e))            # scatter indices (8 replicated rows)
    node = pl.BlockSpec((n_pad, h), lambda e: (0, 0))           # resident across the edge grid
    w = lambda shape: pl.BlockSpec(shape, lambda e: (0, 0))     # weights stay VMEM-resident

    return pl.pallas_call(
        _bgc_kernel,
        out_shape=jax.ShapeDtypeStruct((n_pad, h), jnp.float32),
        grid_spec=pltpu.PrefetchScalarGridSpec(
            num_scalar_prefetch=0,
            grid=(e_pad // te,),
            in_specs=[edge_h, edge_h, edge_1, idx_sp, node,
                      w((2 * h, h)), w((1, h)), w((1, h)),
                      w((h, h)), w((1, h)),
                      w((2 * h, h)), w((1, h)), w((h, h)), w((1, h))],
            out_specs=node,
            scratch_shapes=[pltpu.VMEM((n_pad, h), jnp.float32)]),
        compiler_params=pltpu.CompilerParams(
            dimension_semantics=("arbitrary",),            # edge axis is a reduction
            vmem_limit_bytes=32 * 1024 * 1024),            # safe on v5e/v6e/v7x
    )(xi, xj, edges['ea'], edges['scatter'], right,
      p['W_lr'], p['b_left'], p['W_edge'], p['W_final'], p['b_final'],
      p['W_out1'], p['b_out1'], p['W_out2'], p['b_out2'])


def readout(params, x_s, x_t, batch_xs, batch_xt, num_graphs, ns, nt):
    dt = x_s.dtype
    ns_p, nt_p = x_s.shape[0], x_t.shape[0]
    # padded node rows get an out-of-range graph id -> zero pooling weight
    bs = jnp.pad(batch_xs.astype(jnp.int32), (0, ns_p - ns), constant_values=num_graphs)
    bt = jnp.pad(batch_xt.astype(jnp.int32), (0, nt_p - nt), constant_values=num_graphs)
    ps = jax.nn.one_hot(bs, num_graphs, dtype=dt).T
    ps = ps / jnp.maximum(ps.sum(axis=1, keepdims=True), 1.0)
    pt = jax.nn.one_hot(bt, num_graphs, dtype=dt).T
    pt = pt / jnp.maximum(pt.sum(axis=1, keepdims=True), 1.0)
    return pl.pallas_call(
        _readout_kernel,
        out_shape=jax.ShapeDtypeStruct((num_graphs, 1), dt),
        in_specs=[VMEM_SPEC] * 12,
        out_specs=VMEM_SPEC,
    )(x_s, x_t, ps, pt,
      params['mlp_xs'][0], params['mlp_xs'][1],
      params['mlp_xt'][0], params['mlp_xt'][1],
      params['fc1'][0], params['fc1'][1],
      params['fc2'][0], params['fc2'][1])


def predictor_forward(params, x_s, x_t, edge_index, edge_attr,
                      batch_xs, batch_xt, num_graphs, *, edge_tile=512):
    hidden = params['hidden_dim']
    ns, nt, e = x_s.shape[0], x_t.shape[0], edge_attr.shape[0]
    ns_p, nt_p = _round_up(ns, 8), _round_up(nt, 8)
    te = min(edge_tile, _round_up(e, 128))
    e_p = _round_up(e, te)

    # pad the node axes once (zero rows); padded rows never feed valid outputs
    x_s = jnp.pad(x_s, ((0, ns_p - ns), (0, 0)))
    x_t = jnp.pad(x_t, ((0, nt_p - nt), (0, 0)))

    x_s = fourier_encode(x_s, hidden)
    x_t = fourier_encode(x_t, hidden)

    # hoist layer-invariant edge prep out of the conv loop (both orientations)
    src = edge_index[0].astype(jnp.int32)
    tgt = edge_index[1].astype(jnp.int32)
    ea_p = jnp.pad(edge_attr, ((0, e_p - e), (0, 0)))

    def _pad_idx(idx, fill):
        return jnp.pad(idx, (0, e_p - e), constant_values=fill)

    def _scatter_rows(idx_padded):
        # (8, E_pad) replicated rows -> clean (8,128)-aligned BlockSpec tiles
        return jnp.broadcast_to(idx_padded[None, :], (8, e_p))

    edges_s_t = dict(                                     # messages x_s -> x_t
        gather_src=_pad_idx(src, 0), gather_tgt=_pad_idx(tgt, 0),
        scatter=_scatter_rows(_pad_idx(tgt, nt_p)), ea=ea_p)
    edges_t_s = dict(                                     # messages x_t -> x_s (inverse edges)
        gather_src=_pad_idx(tgt, 0), gather_tgt=_pad_idx(src, 0),
        scatter=_scatter_rows(_pad_idx(src, ns_p)), ea=ea_p)

    for p_st, p_ts in zip(params['conv_s_t'], params['conv_t_s']):
        new_x_t = bipartite_graph_conv(p_st, x_s, x_t, edges_s_t, te)
        new_x_s = bipartite_graph_conv(p_ts, x_t, x_s, edges_t_s, te)
        x_t, x_s = new_x_t, new_x_s

    return readout(params, x_s, x_t, batch_xs, batch_xt, num_graphs, ns, nt)


# --------------------------- parameter init ---------------------------------

def _linear(key, n_in, n_out, bias=True, scale=0.1):
    kw, kb = jax.random.split(key)
    w = jax.random.normal(kw, (n_in, n_out), jnp.float32) * scale
    b = jax.random.normal(kb, (1, n_out), jnp.float32) * scale if bias else None
    return w, b


def _init_bgc(key, h):
    ks = jax.random.split(key, 6)
    wl, bl = _linear(ks[0], h, h)
    we, _ = _linear(ks[1], 1, h, bias=False)
    wr, _ = _linear(ks[2], h, h, bias=False)
    wf, bf = _linear(ks[3], h, h)
    wo1, bo1 = _linear(ks[4], 2 * h, h)
    wo2, bo2 = _linear(ks[5], h, h)
    return dict(W_lr=jnp.concatenate([wl, wr], axis=0),   # fused K=2H message weight
                b_left=bl, W_edge=we,
                W_final=wf, b_final=bf,
                W_out1=wo1, b_out1=bo1, W_out2=wo2, b_out2=bo2)


def init_predictor(key, input_dim_xs, input_dim_xt, input_dim_edge,
                   num_layers, hidden_dim, mlp_hidden_dim):
    del input_dim_edge  # torch module hard-codes the edge Linear to in_features=1
    keys = jax.random.split(key, 2 * num_layers + 4)
    conv_s_t = [_init_bgc(keys[i], hidden_dim) for i in range(num_layers)]
    conv_t_s = [_init_bgc(keys[num_layers + i], hidden_dim) for i in range(num_layers)]
    mlp_xs = _linear(keys[2 * num_layers + 0], hidden_dim, mlp_hidden_dim)
    mlp_xt = _linear(keys[2 * num_layers + 1], hidden_dim, mlp_hidden_dim)
    fc1 = _linear(keys[2 * num_layers + 2], mlp_hidden_dim, mlp_hidden_dim)
    fc2 = _linear(keys[2 * num_layers + 3], mlp_hidden_dim, 1)
    return dict(hidden_dim=hidden_dim, conv_s_t=conv_s_t, conv_t_s=conv_t_s,
                mlp_xs=mlp_xs, mlp_xt=mlp_xt, fc1=fc1, fc2=fc2)


# ------------------------- pure-JAX reference --------------------------------

def _ref_fourier(x, hidden):
    din = x.shape[1]
    level = hidden / (2 * din)
    scales = 2.0 ** jnp.arange(-level / 2, level / 2, dtype=x.dtype)
    ms = (x[:, None, :] / scales[None, :, None]).reshape(x.shape[0], -1)
    return jnp.concatenate([jnp.sin(ms), jnp.cos(ms)], axis=1)


def _ref_bgc(p, left, right, src, tgt, edge_attr):
    h = right.shape[1]
    wl, wr = p['W_lr'][:h], p['W_lr'][h:]
    xi, xj = right[tgt], left[src]
    z = xi @ wl + p['b_left'] + edge_attr * p['W_edge'] + xj @ wr
    m = jnp.maximum(z, 0.0) @ p['W_final'] + p['b_final']
    agg = jax.ops.segment_sum(m, tgt, num_segments=right.shape[0])
    hh = jnp.concatenate([agg, right], axis=-1)
    h1 = jnp.maximum(hh @ p['W_out1'] + p['b_out1'], 0.0)
    return h1 @ p['W_out2'] + p['b_out2']


def ref_forward(params, x_s, x_t, edge_index, edge_attr, batch_xs, batch_xt, num_graphs):
    hidden = params['hidden_dim']
    x_s = _ref_fourier(x_s, hidden)
    x_t = _ref_fourier(x_t, hidden)
    src, tgt = edge_index[0], edge_index[1]
    for p_st, p_ts in zip(params['conv_s_t'], params['conv_t_s']):
        new_x_t = _ref_bgc(p_st, x_s, x_t, src, tgt, edge_attr)
        new_x_s = _ref_bgc(p_ts, x_t, x_s, tgt, src, edge_attr)
        x_t, x_s = new_x_t, new_x_s
    ys = jnp.maximum(x_s @ params['mlp_xs'][0] + params['mlp_xs'][1], 0.0)
    yt = jnp.maximum(x_t @ params['mlp_xt'][0] + params['mlp_xt'][1], 0.0)
    ones_s = jnp.ones((ys.shape[0], 1), ys.dtype)
    ones_t = jnp.ones((yt.shape[0], 1), yt.dtype)
    gs = jax.ops.segment_sum(ys, batch_xs, num_segments=num_graphs) / jnp.maximum(
        jax.ops.segment_sum(ones_s, batch_xs, num_segments=num_graphs), 1.0)
    gt = jax.ops.segment_sum(yt, batch_xt, num_segments=num_graphs) / jnp.maximum(
        jax.ops.segment_sum(ones_t, batch_xt, num_segments=num_graphs), 1.0)
    g = (gs + gt) * 0.5
    h = jnp.maximum(g @ params['fc1'][0] + params['fc1'][1], 0.0)
    return h @ params['fc2'][0] + params['fc2'][1]


# ------------------------------------ main -----------------------------------

if __name__ == "__main__":
    key = jax.random.PRNGKey(0)
    input_dim_xs, input_dim_xt, input_dim_edge = 2, 2, 1
    num_layers, hidden_dim, mlp_hidden_dim = 2, 32, 32
    Ns, Nt, E, G = 12, 10, 300, 2

    ks = jax.random.split(key, 6)
    x_s = jax.random.normal(ks[0], (Ns, input_dim_xs), jnp.float32)
    x_t = jax.random.normal(ks[1], (Nt, input_dim_xt), jnp.float32)
    src = jax.random.randint(ks[2], (E,), 0, Ns)
    tgt = jax.random.randint(ks[3], (E,), 0, Nt)
    edge_index = jnp.stack([src, tgt])                       # (2, E)
    edge_attr = jax.random.normal(ks[4], (E, 1), jnp.float32)
    batch_xs = jnp.concatenate([jnp.zeros(Ns // 2, jnp.int32), jnp.ones(Ns - Ns // 2, jnp.int32)])
    batch_xt = jnp.concatenate([jnp.zeros(Nt // 2, jnp.int32), jnp.ones(Nt - Nt // 2, jnp.int32)])

    params = init_predictor(ks[5], input_dim_xs, input_dim_xt, input_dim_edge,
                            num_layers, hidden_dim, mlp_hidden_dim)

    # edge_tile=128 -> a 3-step edge grid at this size (exercises the accumulator path)
    out = predictor_forward(params, x_s, x_t, edge_index, edge_attr,
                            batch_xs, batch_xt, num_graphs=G, edge_tile=128)
    out = jax.block_until_ready(out)
    assert out.shape == (G, 1), out.shape

    ref = ref_forward(params, x_s, x_t, edge_index, edge_attr,
                      batch_xs, batch_xt, num_graphs=G)
    np.testing.assert_allclose(np.asarray(out), np.asarray(ref), rtol=5e-2, atol=5e-2)
    print("KERNEL_OK")
</pallas_src>

<mosaic_0001>
module attributes {stable_mosaic.version = 11 : i64} {
  func.func @_fourier_kernel(%arg0: memref<16x2xf32, #tpu.memory_space<vmem>>, %arg1: memref<16x32xf32, #tpu.memory_space<vmem>>) attributes {dimension_semantics = [], scalar_prefetch = 0 : i64, scratch_operands = 0 : i64, tpu.core_type = #tpu.core_type<tc>} {
    %c0 = arith.constant 0 : index
    %c0_0 = arith.constant 0 : index
    %0 = vector.load %arg0[%c0, %c0_0] : memref<16x2xf32, #tpu.memory_space<vmem>>, vector<16x2xf32>
    %cst = arith.constant 1.600000e+01 : f32
    %1 = vector.broadcast %cst : f32 to vector<16x2xf32>
    %2 = arith.mulf %0, %1 : vector<16x2xf32>
    %cst_1 = arith.constant 8.000000e+00 : f32
    %3 = vector.broadcast %cst_1 : f32 to vector<16x2xf32>
    %4 = arith.mulf %0, %3 : vector<16x2xf32>
    %cst_2 = arith.constant 4.000000e+00 : f32
    %5 = vector.broadcast %cst_2 : f32 to vector<16x2xf32>
    %6 = arith.mulf %0, %5 : vector<16x2xf32>
    %cst_3 = arith.constant 2.000000e+00 : f32
    %7 = vector.broadcast %cst_3 : f32 to vector<16x2xf32>
    %8 = arith.mulf %0, %7 : vector<16x2xf32>
    %cst_4 = arith.constant 1.000000e+00 : f32
    %9 = vector.broadcast %cst_4 : f32 to vector<16x2xf32>
    %10 = arith.mulf %0, %9 : vector<16x2xf32>
    %cst_5 = arith.constant 5.000000e-01 : f32
    %11 = vector.broadcast %cst_5 : f32 to vector<16x2xf32>
    %12 = arith.mulf %0, %11 : vector<16x2xf32>
    %cst_6 = arith.constant 2.500000e-01 : f32
    %13 = vector.broadcast %cst_6 : f32 to vector<16x2xf32>
    %14 = arith.mulf %0, %13 : vector<16x2xf32>
    %cst_7 = arith.constant 1.250000e-01 : f32
    %15 = vector.broadcast %cst_7 : f32 to vector<16x2xf32>
    %16 = arith.mulf %0, %15 : vector<16x2xf32>
    %17 = tpu.concatenate %2, %4, %6, %8, %10, %12, %14, %16 in 1 : vector<16x2xf32>, vector<16x2xf32>, vector<16x2xf32>, vector<16x2xf32>, vector<16x2xf32>, vector<16x2xf32>, vector<16x2xf32>, vector<16x2xf32> -> vector<16x16xf32>
    %18 = math.sin %17 : vector<16x16xf32>
    %19 = math.cos %17 : vector<16x16xf32>
    %20 = tpu.concatenate %18, %19 in 1 : vector<16x16xf32>, vector<16x16xf32> -> vector<16x32xf32>
    %c0_8 = arith.constant 0 : index
    %c0_9 = arith.constant 0 : index
    %21 = vector.load %arg1[%c0_8, %c0_9] : memref<16x32xf32, #tpu.memory_space<vmem>>, vector<16x32xf32>
    tpu.vector_store %arg1[%c0_8, %c0_9], %20 {strides = array<i32>} : memref<16x32xf32, #tpu.memory_space<vmem>>, vector<16x32xf32>,
    return
  }
}

</mosaic_0001>

<llo_original>
// kernel: tpu_custom_call.1
$region0: #{tpu_custom_call.1}
  #allocation0 [shape = 'u32[]', space=smem, size = 0x4, offset = 0x4, fixed_abs, tag = 'smem constant byte address 0x4 - core index']
  #allocation1 [shape = 'u32[144,128]{1,0:T(1,128)}', space=vmem, size = 0x12000, scoped, tag = 'internal scratch']
  %s0 = inlined_call_operand.vmem [shape: f32[16,2], index: 0, kind: input, shape index: {}]
  %s1 = inlined_call_operand.hbm [shape: f32[16,32], index: 1, kind: output, shape index: {}]
  %s2 = sld [smem:[#allocation0]]
  $region14: #{tpu_custom_call.1} parent=0
    _
  %s4 = ssub.s32 1, %s2
  %s5 = scalar_select 0, %s4, %s2
  $region1: #{tpu_custom_call.1} parent=0
    #allocation2 [shape = 'u8[8192]{0}', space=vmem, size = 0x2000, scoped, tag = 'output window, operand 0, single buffered']
    #allocation3 [shape = 's32[1]{0}', space=sflag, size = 0x4, scoped, tag = 'scoped memory for tpu_custom_call.1']
    %6 = vsyncpa [#allocation3], 0
    // Predicated region
    $region2: #{tpu_custom_call.1} parent=1 // pred_check
      _
    $region3: #{tpu_custom_call.1} parent=1 // pred_check_branch
      %8 = sbr.rel (0) target = $region5
    $region4: #{tpu_custom_call.1} parent=1 // pred_region
      _
    $region5: #{tpu_custom_call.1} parent=1 // pred_fallthru
      _
    %v9 = vld [vmem:[%s0] sm:$0xff]
    %v10 = vld [vmem:[%s0 + $0x8] sm:$0xff]
    %v11 = vmul.f32 %v9, 16.0
    %v12 = vmul.f32 %v10, 16.0
    %v13 = vmul.f32 %v9, 8.0
    %v14 = vmul.f32 %v10, 8.0
    %v15 = vmul.f32 %v9, 4.0
    %v16 = vmul.f32 %v10, 4.0
    %v17 = vmul.f32 %v9, 2.0
    %v18 = vmul.f32 %v10, 2.0
    %v19 = vmul.f32 %v9, 0.5
    %v20 = vmul.f32 %v10, 0.5
    %v21 = vmul.f32 %v9, 0.25
    %v22 = vmul.f32 %v10, 0.25
    %v23 = vmul.f32 %v9, 0.125
    %v24 = vmul.f32 %v10, 0.125
    %27 = vrot.lane.b32.xlu0 %v13, 2
    %v28 = vpop.permute.xlu0 %27
    %29 = vrot.lane.b32.xlu0 %v14, 2
    %v30 = vpop.permute.xlu0 %29
    %35 = vrot.lane.b32.xlu0 %v15, 4
    %v36 = vpop.permute.xlu0 %35
    %37 = vrot.lane.b32.xlu0 %v16, 4
    %v38 = vpop.permute.xlu0 %37
    %43 = vrot.lane.b32.xlu0 %v17, 6
    %v44 = vpop.permute.xlu0 %43
    %45 = vrot.lane.b32.xlu0 %v18, 6
    %v46 = vpop.permute.xlu0 %45
    %51 = vrot.lane.b32.xlu0 %v9, 8
    %v52 = vpop.permute.xlu0 %51
    %53 = vrot.lane.b32.xlu0 %v10, 8
    %v54 = vpop.permute.xlu0 %53
    %59 = vrot.lane.b32.xlu0 %v19, 10
    %v60 = vpop.permute.xlu0 %59
    %61 = vrot.lane.b32.xlu0 %v20, 10
    %v62 = vpop.permute.xlu0 %61
    %67 = vrot.lane.b32.xlu0 %v21, 12
    %v68 = vpop.permute.xlu0 %67
    %69 = vrot.lane.b32.xlu0 %v22, 12
    %v70 = vpop.permute.xlu0 %69
    %75 = vrot.lane.b32.xlu0 %v23, 14
    %v76 = vpop.permute.xlu0 %75
    %77 = vrot.lane.b32.xlu0 %v24, 14
    %v78 = vpop.permute.xlu0 %77
    %vm81 = vcmask 15360
    %v82 = vsel %vm81, %v11, %v28
    %v83 = vsel %vm81, %v12, %v30
    %vm84 = vcmask 31744
    %v85 = vsel %vm84, %v82, %v36
    %v86 = vsel %vm84, %v83, %v38
    %vm87 = vcmask 48128
    %v88 = vsel %vm87, %v85, %v44
    %v89 = vsel %vm87, %v86, %v46
    %vm90 = vcmask 64512
    %v91 = vsel %vm90, %v88, %v52
    %v92 = vsel %vm90, %v89, %v54
    %vm93 = vcmask 80896
    %v94 = vsel %vm93, %v91, %v60
    %v95 = vsel %vm93, %v92, %v62
    %vm96 = vcmask 97280
    %v97 = vsel %vm96, %v94, %v68
    %v98 = vsel %vm96, %v95, %v70
    %vm99 = vcmask 113664
    %v100 = vsel %vm99, %v97, %v76
    %v101 = vsel %vm99, %v98, %v78
    %v102 = vand.u32 2147483647, %v100
    %vm103 = vcmp.le.f32.partialorder %v102, 0.7853982
    %vm104 = vcmp.lt.s32.totalorder %v100, 0
    %v105 = vand.u32 %v100, 2139095040
    %v106 = vshrl.u32 %v105, 23
    %v107 = vsub.s32 %v106, 127
    %v108 = vand.u32 2147483647, %v100
    %v109 = vand.u32 %v108, 8388607
    %v110 = vor.u32 %v109, 8388608
    %v111 = vsub.s32 0, %v110
    %v112 = vadd.s32 %v107, 1
    %vm113 = vcmp.gt.s32.totalorder %v112, 0
    %v114 = vsel %vm113, %v112, 0
    %v115 = vshrl.u32 %v114, 5
    %v116 = vand.u32 %v114, 31
    %v117 = vsub.s32 32, %v116
    %v118 = vshrl.u32 683565275, %v117
    %v119 = vshll.u32 683565275, %v116
    %v120 = vshrl.u32 2475754826, %v117
    %v121 = vor.u32 %v119, %v120
    %v122 = vshll.u32 2475754826, %v116
    %v123 = vshrl.u32 2131351028, %v117
    %v124 = vor.u32 %v122, %v123
    %v125 = vshll.u32 2131351028, %v116
    %v126 = vshrl.u32 2102212464, %v117
    %v127 = vor.u32 %v125, %v126
    %v128 = vshll.u32 2102212464, %v116
    %v129 = vshrl.u32 920167782, %v117
    %v130 = vor.u32 %v128, %v129
    %v131 = vshll.u32 920167782, %v116
    %v132 = vshrl.u32 1326507024, %v117
    %v133 = vor.u32 %v131, %v132
    %vm134 = vcmp.lt.s32.totalorder %v115, 1
    %vm135 = vcmp.lt.s32.totalorder %v115, 2
    %vm136 = vcmp.lt.s32.totalorder %v115, 3
    %vm137 = vcmp.lt.s32.totalorder %v115, 4
    %v138 = vsel %vm134, %v118, %v121
    %v139 = vsel %vm137, %v127, 2102212464
    %v140 = vsel %vm136, %v124, %v139
    %v141 = vsel %vm135, %v138, %v140
    %v142 = vsel %vm134, %v121, %v124
    %v143 = vsel %vm137, %v130, 920167782
    %v144 = vsel %vm136, %v127, %v143
    %v145 = vsel %vm135, %v142, %v144
    %v146 = vsel %vm134, %v124, %v127
    %v147 = vsel %vm137, %v133, 1326507024
    %v148 = vsel %vm136, %v130, %v147
    %v149 = vsel %vm135, %v146, %v148
    %v150 = vshll.u32 %v110, 8
    %v151 = vmul.u32.u64.compose %v150, %v149
    %v152 = vextract.low.u32 %v151
    %v153 = vextract.high.u32 %v151
    %v154 = vmul.u32.u64.compose %v150, %v145
    %v155 = vextract.low.u32 %v154
    %v156 = vextract.high.u32 %v154
    %v157 = vmul.u32 %v150, %v141
    %v158 = vadd.s32 %v153, %v155
    %vm159 = vc.u32 %v153, %v155
    %v160 = vadd.s32 %v156, 1
    %v161 = vsel %vm159, %v160, %v156
    %v162 = vadd.s32 %v157, %v161
    %v163 = vadd.s32 %v162, 536870912
    %v164 = vshrl.u32 %v163, 30
    %v165 = vshll.u32 %v164, 30
    %v166 = vsub.s32 %v162, %v165
    %vm167 = vcmp.lt.s32.totalorder %v166, 0
    %v168 = vsub.s32 0, %v166
    %v169 = vsel %vm167, %v168, %v166
    %v170 = vclz %v169
    %v171 = vsub.s32 %v170, 2
    %vm172 = vcmp.gt.s32.totalorder 0, %v171
    %v173 = vsel %vm172, 0, %v171
    %v174 = vsub.s32 32, %v173
    %v175 = vshll.u32 %v166, %v173
    %v176 = vshrl.u32 %v158, %v174
    %v177 = vor.u32 %v175, %v176
    %v178 = vsub.s32 4294967266, %v173
    %v179 = vadd.s32 %v178, 127
    %v180 = vshll.u32 %v179, 23
    %v181 = vor.u32 4788187, %v180
    %v182 = vand.u32 2147483647, %v181
    %v184 = vcvt.s32.f32 %v177
    %v185 = vmul.f32 %v184, %v182
    %v186 = vxor.u32 %v185, 2147483648
    %v187 = vsel %vm104, %v186, %v185
    %v188 = vsub.s32 4, %v164
    %v189 = vsel %vm104, %v188, %v164
    %v190 = vsel %vm103, %v100, %v187
    %v191 = vsel %vm103, 0, %v189
    %v192 = vcosq.f32.pop %v190
    %v193 = vsinq.f32.pop %v190
    %vm194 = vweird.f32 %v100
    %v195 = vadd.s32 %v191, 3
    %v196 = vand.u32 %v195, 3
    %vm197 = vcmp.lt.s32.totalorder %v196, 2
    %vm198 = vcmp.eq.s32.totalorder %v196, 0
    %v199 = vxor.u32 %v193, 2147483648
    %v200 = vsel %vm198, %v192, %v199
    %vm201 = vcmp.eq.s32.totalorder %v196, 2
    %v202 = vxor.u32 %v192, 2147483648
    %v203 = vsel %vm201, %v202, %v193
    %v204 = vsel %vm197, %v200, %v203
    %v205 = vsel %vm194, nan, %v204
    %v206 = vand.u32 2147483647, %v101
    %vm207 = vcmp.le.f32.partialorder %v206, 0.7853982
    %vm208 = vcmp.lt.s32.totalorder %v101, 0
    %v209 = vand.u32 %v101, 2139095040
    %v210 = vshrl.u32 %v209, 23
    %v211 = vsub.s32 %v210, 127
    %v212 = vand.u32 2147483647, %v101
    %v213 = vand.u32 %v212, 8388607
    %v214 = vor.u32 %v213, 8388608
    %v215 = vsub.s32 0, %v214
    %v216 = vadd.s32 %v211, 1
    %vm217 = vcmp.gt.s32.totalorder %v216, 0
    %v218 = vsel %vm217, %v216, 0
    %v219 = vshrl.u32 %v218, 5
    %v220 = vand.u32 %v218, 31
    %v221 = vsub.s32 32, %v220
    %v222 = vshrl.u32 683565275, %v221
    %v223 = vshll.u32 683565275, %v220
    %v224 = vshrl.u32 2475754826, %v221
    %v225 = vor.u32 %v223, %v224
    %v226 = vshll.u32 2475754826, %v220
    %v227 = vshrl.u32 2131351028, %v221
    %v228 = vor.u32 %v226, %v227
    %v229 = vshll.u32 2131351028, %v220
    %v230 = vshrl.u32 2102212464, %v221
    %v231 = vor.u32 %v229, %v230
    %v232 = vshll.u32 2102212464, %v220
    %v233 = vshrl.u32 920167782, %v221
    %v234 = vor.u32 %v232, %v233
    %v235 = vshll.u32 920167782, %v220
    %v236 = vshrl.u32 1326507024, %v221
    %v237 = vor.u32 %v235, %v236
    %vm238 = vcmp.lt.s32.totalorder %v219, 1
    %vm239 = vcmp.lt.s32.totalorder %v219, 2
    %vm240 = vcmp.lt.s32.totalorder %v219, 3
    %vm241 = vcmp.lt.s32.totalorder %v219, 4
    %v242 = vsel %vm238, %v222, %v225
    %v243 = vsel %vm241, %v231, 2102212464
    %v244 = vsel %vm240, %v228, %v243
    %v245 = vsel %vm239, %v242, %v244
    %v246 = vsel %vm238, %v225, %v228
    %v247 = vsel %vm241, %v234, 920167782
    %v248 = vsel %vm240, %v231, %v247
    %v249 = vsel %vm239, %v246, %v248
    %v250 = vsel %vm238, %v228, %v231
    %v251 = vsel %vm241, %v237, 1326507024
    %v252 = vsel %vm240, %v234, %v251
    %v253 = vsel %vm239, %v250, %v252
    %v254 = vshll.u32 %v214, 8
    %v255 = vmul.u32.u64.compose %v254, %v253
    %v256 = vextract.low.u32 %v255
    %v257 = vextract.high.u32 %v255
    %v258 = vmul.u32.u64.compose %v254, %v249
    %v259 = vextract.low.u32 %v258
    %v260 = vextract.high.u32 %v258
    %v261 = vmul.u32 %v254, %v245
    %v262 = vadd.s32 %v257, %v259
    %vm263 = vc.u32 %v257, %v259
    %v264 = vadd.s32 %v260, 1
    %v265 = vsel %vm263, %v264, %v260
    %v266 = vadd.s32 %v261, %v265
    %v267 = vadd.s32 %v266, 536870912
    %v268 = vshrl.u32 %v267, 30
    %v269 = vshll.u32 %v268, 30
    %v270 = vsub.s32 %v266, %v269
    %vm271 = vcmp.lt.s32.totalorder %v270, 0
    %v272 = vsub.s32 0, %v270
    %v273 = vsel %vm271, %v272, %v270
    %v274 = vclz %v273
    %v275 = vsub.s32 %v274, 2
    %vm276 = vcmp.gt.s32.totalorder 0, %v275
    %v277 = vsel %vm276, 0, %v275
    %v278 = vsub.s32 32, %v277
    %v279 = vshll.u32 %v270, %v277
    %v280 = vshrl.u32 %v262, %v278
    %v281 = vor.u32 %v279, %v280
    %v282 = vsub.s32 4294967266, %v277
    %v283 = vadd.s32 %v282, 127
    %v284 = vshll.u32 %v283, 23
    %v285 = vor.u32 4788187, %v284
    %v286 = vand.u32 2147483647, %v285
    %v288 = vcvt.s32.f32 %v281
    %v289 = vmul.f32 %v288, %v286
    %v290 = vxor.u32 %v289, 2147483648
    %v291 = vsel %vm208, %v290, %v289
    %v292 = vsub.s32 4, %v268
    %v293 = vsel %vm208, %v292, %v268
    %v294 = vsel %vm207, %v101, %v291
    %v295 = vsel %vm207, 0, %v293
    %v296 = vcosq.f32.pop %v294
    %v297 = vsinq.f32.pop %v294
    %vm298 = vweird.f32 %v101
    %v299 = vadd.s32 %v295, 3
    %v300 = vand.u32 %v299, 3
    %vm301 = vcmp.lt.s32.totalorder %v300, 2
    %vm302 = vcmp.eq.s32.totalorder %v300, 0
    %v303 = vxor.u32 %v297, 2147483648
    %v304 = vsel %vm302, %v296, %v303
    %vm305 = vcmp.eq.s32.totalorder %v300, 2
    %v306 = vxor.u32 %v296, 2147483648
    %v307 = vsel %vm305, %v306, %v297
    %v308 = vsel %vm301, %v304, %v307
    %v309 = vsel %vm298, nan, %v308
    %v310 = vand.u32 2147483647, %v100
    %vm311 = vcmp.le.f32.partialorder %v310, 0.7853982
    %vm312 = vcmp.lt.s32.totalorder %v100, 0
    %v313 = vand.u32 %v100, 2139095040
    %v314 = vshrl.u32 %v313, 23
    %v315 = vsub.s32 %v314, 127
    %v316 = vand.u32 2147483647, %v100
    %v317 = vand.u32 %v316, 8388607
    %v318 = vor.u32 %v317, 8388608
    %v319 = vsub.s32 0, %v318
    %v320 = vadd.s32 %v315, 1
    %vm321 = vcmp.gt.s32.totalorder %v320, 0
    %v322 = vsel %vm321, %v320, 0
    %v323 = vshrl.u32 %v322, 5
    %v324 = vand.u32 %v322, 31
    %v325 = vsub.s32 32, %v324
    %v326 = vshrl.u32 683565275, %v325
    %v327 = vshll.u32 683565275, %v324
    %v328 = vshrl.u32 2475754826, %v325
    %v329 = vor.u32 %v327, %v328
    %v330 = vshll.u32 2475754826, %v324
    %v331 = vshrl.u32 2131351028, %v325
    %v332 = vor.u32 %v330, %v331
    %v333 = vshll.u32 2131351028, %v324
    %v334 = vshrl.u32 2102212464, %v325
    %v335 = vor.u32 %v333, %v334
    %v336 = vshll.u32 2102212464, %v324
    %v337 = vshrl.u32 920167782, %v325
    %v338 = vor.u32 %v336, %v337
    %v339 = vshll.u32 920167782, %v324
    %v340 = vshrl.u32 1326507024, %v325
    %v341 = vor.u32 %v339, %v340
    %vm342 = vcmp.lt.s32.totalorder %v323, 1
    %vm343 = vcmp.lt.s32.totalorder %v323, 2
    %vm344 = vcmp.lt.s32.totalorder %v323, 3
    %vm345 = vcmp.lt.s32.totalorder %v323, 4
    %v346 = vsel %vm342, %v326, %v329
    %v347 = vsel %vm345, %v335, 2102212464
    %v348 = vsel %vm344, %v332, %v347
    %v349 = vsel %vm343, %v346, %v348
    %v350 = vsel %vm342, %v329, %v332
    %v351 = vsel %vm345, %v338, 920167782
    %v352 = vsel %vm344, %v335, %v351
    %v353 = vsel %vm343, %v350, %v352
    %v354 = vsel %vm342, %v332, %v335
    %v355 = vsel %vm345, %v341, 1326507024
    %v356 = vsel %vm344, %v338, %v355
    %v357 = vsel %vm343, %v354, %v356
    %v358 = vshll.u32 %v318, 8
    %v359 = vmul.u32.u64.compose %v358, %v357
    %v360 = vextract.low.u32 %v359
    %v361 = vextract.high.u32 %v359
    %v362 = vmul.u32.u64.compose %v358, %v353
    %v363 = vextract.low.u32 %v362
    %v364 = vextract.high.u32 %v362
    %v365 = vmul.u32 %v358, %v349
    %v366 = vadd.s32 %v361, %v363
    %vm367 = vc.u32 %v361, %v363
    %v368 = vadd.s32 %v364, 1
    %v369 = vsel %vm367, %v368, %v364
    %v370 = vadd.s32 %v365, %v369
    %v371 = vadd.s32 %v370, 536870912
    %v372 = vshrl.u32 %v371, 30
    %v373 = vshll.u32 %v372, 30
    %v374 = vsub.s32 %v370, %v373
    %vm375 = vcmp.lt.s32.totalorder %v374, 0
    %v376 = vsub.s32 0, %v374
    %v377 = vsel %vm375, %v376, %v374
    %v378 = vclz %v377
    %v379 = vsub.s32 %v378, 2
    %vm380 = vcmp.gt.s32.totalorder 0, %v379
    %v381 = vsel %vm380, 0, %v379
    %v382 = vsub.s32 32, %v381
    %v383 = vshll.u32 %v374, %v381
    %v384 = vshrl.u32 %v366, %v382
    %v385 = vor.u32 %v383, %v384
    %v386 = vsub.s32 4294967266, %v381
    %v387 = vadd.s32 %v386, 127
    %v388 = vshll.u32 %v387, 23
    %v389 = vor.u32 4788187, %v388
    %v390 = vand.u32 2147483647, %v389
    %v392 = vcvt.s32.f32 %v385
    %v393 = vmul.f32 %v392, %v390
    %v394 = vxor.u32 %v393, 2147483648
    %v395 = vsel %vm312, %v394, %v393
    %v396 = vsub.s32 4, %v372
    %v397 = vsel %vm312, %v396, %v372
    %v398 = vsel %vm311, %v100, %v395
    %v399 = vsel %vm311, 0, %v397
    %v400 = vcosq.f32.pop %v398
    %v401 = vsinq.f32.pop %v398
    %vm402 = vweird.f32 %v100
    %v403 = vand.u32 %v399, 3
    %vm404 = vcmp.lt.s32.totalorder %v403, 2
    %vm405 = vcmp.eq.s32.totalorder %v403, 0
    %v406 = vxor.u32 %v401, 2147483648
    %v407 = vsel %vm405, %v400, %v406
    %vm408 = vcmp.eq.s32.totalorder %v403, 2
    %v409 = vxor.u32 %v400, 2147483648
    %v410 = vsel %vm408, %v409, %v401
    %v411 = vsel %vm404, %v407, %v410
    %v412 = vsel %vm402, nan, %v411
    %v413 = vand.u32 2147483647, %v101
    %vm414 = vcmp.le.f32.partialorder %v413, 0.7853982
    %vm415 = vcmp.lt.s32.totalorder %v101, 0
    %v416 = vand.u32 %v101, 2139095040
    %v417 = vshrl.u32 %v416, 23
    %v418 = vsub.s32 %v417, 127
    %v419 = vand.u32 2147483647, %v101
    %v420 = vand.u32 %v419, 8388607
    %v421 = vor.u32 %v420, 8388608
    %v422 = vsub.s32 0, %v421
    %v423 = vadd.s32 %v418, 1
    %vm424 = vcmp.gt.s32.totalorder %v423, 0
    %v425 = vsel %vm424, %v423, 0
    %v426 = vshrl.u32 %v425, 5
    %v427 = vand.u32 %v425, 31
    %v428 = vsub.s32 32, %v427
    %v429 = vshrl.u32 683565275, %v428
    %v430 = vshll.u32 683565275, %v427
    %v431 = vshrl.u32 2475754826, %v428
    %v432 = vor.u32 %v430, %v431
    %v433 = vshll.u32 2475754826, %v427
    %v434 = vshrl.u32 2131351028, %v428
    %v435 = vor.u32 %v433, %v434
    %v436 = vshll.u32 2131351028, %v427
    %v437 = vshrl.u32 2102212464, %v428
    %v438 = vor.u32 %v436, %v437
    %v439 = vshll.u32 2102212464, %v427
    %v440 = vshrl.u32 920167782, %v428
    %v441 = vor.u32 %v439, %v440
    %v442 = vshll.u32 920167782, %v427
    %v443 = vshrl.u32 1326507024, %v428
    %v444 = vor.u32 %v442, %v443
    %vm445 = vcmp.lt.s32.totalorder %v426, 1
    %vm446 = vcmp.lt.s32.totalorder %v426, 2
    %vm447 = vcmp.lt.s32.totalorder %v426, 3
    %vm448 = vcmp.lt.s32.totalorder %v426, 4
    %v449 = vsel %vm445, %v429, %v432
    %v450 = vsel %vm448, %v438, 2102212464
    %v451 = vsel %vm447, %v435, %v450
    %v452 = vsel %vm446, %v449, %v451
    %v453 = vsel %vm445, %v432, %v435
    %v454 = vsel %vm448, %v441, 920167782
    %v455 = vsel %vm447, %v438, %v454
    %v456 = vsel %vm446, %v453, %v455
    %v457 = vsel %vm445, %v435, %v438
    %v458 = vsel %vm448, %v444, 1326507024
    %v459 = vsel %vm447, %v441, %v458
    %v460 = vsel %vm446, %v457, %v459
    %v461 = vshll.u32 %v421, 8
    %v462 = vmul.u32.u64.compose %v461, %v460
    %v463 = vextract.low.u32 %v462
    %v464 = vextract.high.u32 %v462
    %v465 = vmul.u32.u64.compose %v461, %v456
    %v466 = vextract.low.u32 %v465
    %v467 = vextract.high.u32 %v465
    %v468 = vmul.u32 %v461, %v452
    %v469 = vadd.s32 %v464, %v466
    %vm470 = vc.u32 %v464, %v466
    %v471 = vadd.s32 %v467, 1
    %v472 = vsel %vm470, %v471, %v467
    %v473 = vadd.s32 %v468, %v472
    %v474 = vadd.s32 %v473, 536870912
    %v475 = vshrl.u32 %v474, 30
    %v476 = vshll.u32 %v475, 30
    %v477 = vsub.s32 %v473, %v476
    %vm478 = vcmp.lt.s32.totalorder %v477, 0
    %v479 = vsub.s32 0, %v477
    %v480 = vsel %vm478, %v479, %v477
    %v481 = vclz %v480
    %v482 = vsub.s32 %v481, 2
    %vm483 = vcmp.gt.s32.totalorder 0, %v482
    %v484 = vsel %vm483, 0, %v482
    %v485 = vsub.s32 32, %v484
    %v486 = vshll.u32 %v477, %v484
    %v487 = vshrl.u32 %v469, %v485
    %v488 = vor.u32 %v486, %v487
    %v489 = vsub.s32 4294967266, %v484
    %v490 = vadd.s32 %v489, 127
    %v491 = vshll.u32 %v490, 23
    %v492 = vor.u32 4788187, %v491
    %v493 = vand.u32 2147483647, %v492
    %v495 = vcvt.s32.f32 %v488
    %v496 = vmul.f32 %v495, %v493
    %v497 = vxor.u32 %v496, 2147483648
    %v498 = vsel %vm415, %v497, %v496
    %v499 = vsub.s32 4, %v475
    %v500 = vsel %vm415, %v499, %v475
    %v501 = vsel %vm414, %v101, %v498
    %v502 = vsel %vm414, 0, %v500
    %v503 = vcosq.f32.pop %v501
    %v504 = vsinq.f32.pop %v501
    %vm505 = vweird.f32 %v101
    %v506 = vand.u32 %v502, 3
    %vm507 = vcmp.lt.s32.totalorder %v506, 2
    %vm508 = vcmp.eq.s32.totalorder %v506, 0
    %v509 = vxor.u32 %v504, 2147483648
    %v510 = vsel %vm508, %v503, %v509
    %vm511 = vcmp.eq.s32.totalorder %v506, 2
    %v512 = vxor.u32 %v503, 2147483648
    %v513 = vsel %vm511, %v512, %v504
    %v514 = vsel %vm507, %v510, %v513
    %v515 = vsel %vm505, nan, %v514
    %518 = vrot.lane.b32.xlu0 %v412, 16
    %v519 = vpop.permute.xlu0 %518
    %520 = vrot.lane.b32.xlu0 %v515, 16
    %v521 = vpop.permute.xlu0 %520
    %vm524 = vcmask 130048
    %v525 = vsel %vm524, %v205, %v519
    %v526 = vsel %vm524, %v309, %v521
    %vm527 = vcmask 261120
    %528 = vst.msk [vmem:[#allocation2] sm:$0xff] %vm527, %v525
    %529 = vst.msk [vmem:[#allocation2 + $0x8] sm:$0xff] %vm527, %v526
    // Predicated region
    $region6: #{tpu_custom_call.1} parent=1 // pred_check
      _
    $region7: #{tpu_custom_call.1} parent=1 // pred_check_branch
      %531 = sbr.rel (0) target = $region9
    $region8: #{tpu_custom_call.1} parent=1 // pred_region
      %s533 = ssub.s32 256, 256
      %534 = vsyncadd [#allocation3], %s533
      %s535 = sshll.u32 [#allocation2], 4
      %s536 = int_to_ptr.vmem [resolvable:$true] %s535
      %541 = dma.vmem_to_hbm [thread:$0]  %s536, 256, %s1, [#allocation3], 128, 128, 8
    $region9: #{tpu_custom_call.1} parent=1 // pred_fallthru
      _
    // Predicated region
    $region10: #{tpu_custom_call.1} parent=1 // pred_check
      _
    $region11: #{tpu_custom_call.1} parent=1 // pred_check_branch
      %543 = sbr.rel (0) target = $region13
    $region12: #{tpu_custom_call.1} parent=1 // pred_region
      %544 = dma.done [#allocation3], 256
    $region13: #{tpu_custom_call.1} parent=1 // pred_fallthru
      _
    %545 = vsyncpa [#allocation3], 1

</llo_original>
